<compile_context>
chip_gen: v6e
topology: v6e:2x2x1
jax: 0.10.0
libtpu: 0.0.40
codegen_flags: <defaults>
</compile_context>

<pallas_src>
import functools

import jax
import jax.numpy as jnp
from jax import lax
from jax.experimental import pallas as pl
from jax.experimental.pallas import tpu as pltpu


def _pick_tile(n, max_tile):
    """Largest lane-legal tile (<= max_tile, multiple of 128, divides n),
    falling back to the full dimension (full-array blocks are always legal)."""
    if n <= max_tile:
        return n
    for t in (max_tile, 1024, 512, 256, 128):
        if t <= max_tile and n % t == 0:
            return t
    # TODO(synk): for large n not divisible by 128, pad n to a multiple of 128
    # instead of falling back to a full-n block (which could exceed v7x VMEM).
    return n


# ---------------------------------------------------------------------------
# fused q/k projection for all heads:  (b, n, dim) @ (dim, 2*h*d)
# ---------------------------------------------------------------------------
def _proj_kernel(x_ref, w_ref, o_ref):
    # x_ref: (1, tp, dim), w_ref: (dim, 2*h*d), o_ref: (1, tp, 2*h*d)
    o_ref[0] = jnp.dot(x_ref[0], w_ref[...],
                       preferred_element_type=jnp.float32)


def _project_qk(x, w_qk, *, tile_n=512):
    b, n, dim = x.shape
    out_dim = w_qk.shape[1]
    tp = _pick_tile(n, tile_n)
    grid = (b, n // tp)
    return pl.pallas_call(
        _proj_kernel,
        out_shape=jax.ShapeDtypeStruct((b, n, out_dim), jnp.float32),
        grid_spec=pltpu.PrefetchScalarGridSpec(
            num_scalar_prefetch=0,
            grid=grid,
            in_specs=[
                pl.BlockSpec((1, tp, dim), lambda bi, ii: (bi, ii, 0)),
                pl.BlockSpec((dim, out_dim), lambda bi, ii: (0, 0)),
            ],
            out_specs=pl.BlockSpec((1, tp, out_dim),
                                   lambda bi, ii: (bi, ii, 0)),
        ),
        compiler_params=pltpu.CompilerParams(
            dimension_semantics=("parallel", "parallel"),
            vmem_limit_bytes=32 * 1024 * 1024),
    )(x, w_qk)


# ---------------------------------------------------------------------------
# tiled score + log-sigmoid + causal mask + blocked reversed cumsum
# ---------------------------------------------------------------------------
def _alibi_kernel(q_ref, k_ref, tri_ref, delta_ref, o_ref, carry_ref, *,
                  scale, post_log_scale, ti, tj, num_j):
    ii = pl.program_id(2)
    ji = pl.program_id(3)            # walks 0..num_j-1; column tile = num_j-1-ji
    j_blk = num_j - 1 - ji

    # reset the suffix-sum carry at the start of each right-to-left sweep
    @pl.when(ji == 0)
    def _():
        carry_ref[...] = jnp.zeros_like(carry_ref)

    # Tile fully above/on the strict causal diagonal <=> its smallest global
    # column >= its largest global row + 1 (conservative, tile-aligned form).
    do_compute = j_blk * tj < (ii + 1) * ti

    @pl.when(jnp.logical_not(do_compute))
    def _():
        # Every element of this tile is masked to zero, so its suffix sum is
        # just the running carry broadcast across the tile; the carry itself
        # is unchanged (this tile contributes nothing to tiles on its left).
        o_ref[0, 0] = jnp.broadcast_to(
            carry_ref[...], (ti, tj)).astype(o_ref.dtype)

    @pl.when(do_compute)
    def _():
        q = q_ref[0, 0]              # (ti, d)
        k = k_ref[0, 0]              # (tj, d)

        # scores: contract last axes of both operands (no explicit k^T)
        s = lax.dot_general(q, k, dimension_numbers=(((1,), (1,)), ((), ())),
                            preferred_element_type=jnp.float32) * scale

        # numerically stable log(sigmoid(s)) = min(s, 0) - log1p(exp(-|s|))
        fg = (jnp.minimum(s, 0.0)
              - jnp.log1p(jnp.exp(-jnp.abs(s)))) * post_log_scale

        # strict-lower causal mask via the resident (col_local - row_local)
        # constant: keep where global col < global row
        #   <=>  (col_local - row_local) < ii*ti - j_blk*tj
        thresh = ii * ti - j_blk * tj
        fg = jnp.where(delta_ref[...] < thresh, fg, 0.0)

        # within-tile suffix sum via MXU matmul with the resident
        # lower-triangular ones matrix (optionally bf16 operands, f32 acc),
        # plus the running carry from all tiles to the right.
        out = jnp.dot(fg.astype(tri_ref.dtype), tri_ref[...],
                      preferred_element_type=jnp.float32)
        out = out + carry_ref[...]
        o_ref[0, 0] = out.astype(o_ref.dtype)

        # carry for the next (left-neighbour) tile = suffix sum at this
        # tile's leftmost column (kept in f32 regardless of output dtype).
        carry_ref[...] = out[:, 0:1]


def per_row_data_dependent_alibi(x, weight, *, heads, dim_head,
                                 post_log_scale=1.0,
                                 tile_q=512, tile_k=128,
                                 mxu_bf16=False,
                                 out_dtype=jnp.float32):
    """x: (b, n, dim) f32; weight: (heads*dim_head*2, dim) f32 (torch layout).

    Returns (b, heads, n, n), identical to the PyTorch module's forward
    (exactly with the default f32 settings; `mxu_bf16=True` trades ~0.2%
    relative error for a much cheaper suffix-sum matmul).
    """
    b, n, dim = x.shape
    scale = dim_head ** (-0.5)

    # torch nn.Linear weight is (out_features, in_features); the out axis
    # decomposes as (qk, heads, dim_head).  One fused x @ W_qk projects q & k
    # for every head in a single wide-N matmul.
    w_qk = jnp.transpose(weight, (1, 0))                  # (dim, 2*h*d)
    y = _project_qk(x, w_qk)                              # (b, n, 2*h*d)
    y = y.reshape(b, n, 2, heads, dim_head)
    y = jnp.transpose(y, (2, 0, 3, 1, 4))                 # (2, b, h, n, d)
    q, k = y[0], y[1]                                     # (b, h, n, d) each

    ti = _pick_tile(n, tile_q)
    tj = _pick_tile(n, tile_k)
    num_i = n // ti
    num_j = n // tj

    sum_dtype = jnp.bfloat16 if mxu_bf16 else jnp.float32
    # Resident constants (constant index_map -> stay in VMEM across steps):
    #   tri:   (tj, tj) lower-triangular ones for the within-tile suffix sum
    #          (exactly representable in bf16, so the bf16 path stays safe)
    #   delta: (ti, tj) col_local - row_local, for the cheap causal mask
    tri = (jnp.arange(tj)[:, None] >= jnp.arange(tj)[None, :]
           ).astype(sum_dtype)
    delta = (jnp.arange(tj)[None, :] - jnp.arange(ti)[:, None]
             ).astype(jnp.int32)

    kernel = functools.partial(
        _alibi_kernel, scale=scale, post_log_scale=post_log_scale,
        ti=ti, tj=tj, num_j=num_j)

    grid_spec = pltpu.PrefetchScalarGridSpec(
        num_scalar_prefetch=0,
        grid=(b, heads, num_i, num_j),
        in_specs=[
            pl.BlockSpec((1, 1, ti, dim_head),
                         lambda bi, hi, ii, ji: (bi, hi, ii, 0)),
            pl.BlockSpec((1, 1, tj, dim_head),
                         lambda bi, hi, ii, ji: (bi, hi, num_j - 1 - ji, 0)),
            pl.BlockSpec((tj, tj), lambda bi, hi, ii, ji: (0, 0)),
            pl.BlockSpec((ti, tj), lambda bi, hi, ii, ji: (0, 0)),
        ],
        out_specs=pl.BlockSpec(
            (1, 1, ti, tj),
            lambda bi, hi, ii, ji: (bi, hi, ii, num_j - 1 - ji)),
        scratch_shapes=[pltpu.VMEM((ti, 1), jnp.float32)],
    )

    return pl.pallas_call(
        kernel,
        out_shape=jax.ShapeDtypeStruct((b, heads, n, n), out_dtype),
        grid_spec=grid_spec,
        compiler_params=pltpu.CompilerParams(
            dimension_semantics=("parallel", "parallel", "parallel",
                                 "arbitrary"),
            vmem_limit_bytes=48 * 1024 * 1024),
    )(q, k, tri, delta)


# ---------------------------------------------------------------------------
# pure-JAX reference mirroring the PyTorch forward exactly
# ---------------------------------------------------------------------------
def _reference(x, weight, *, heads, dim_head, post_log_scale=1.0):
    b, n, dim = x.shape
    scale = dim_head ** (-0.5)
    y = x @ weight.T                                      # (b, n, 2*h*d)
    y = y.reshape(b, n, 2, heads, dim_head)               # (b, n, qk, h, d)
    y = jnp.transpose(y, (2, 0, 3, 1, 4))                 # (qk, b, h, n, d)
    q, k = y[0], y[1]
    fg = jnp.einsum('bhid,bhjd->bhij', q, k) * scale
    fg = jax.nn.log_sigmoid(fg) * post_log_scale
    row = jnp.arange(n)[:, None]
    col = jnp.arange(n)[None, :]
    fg = jnp.where(col >= row, 0.0, fg)                   # masked_fill(triu, 0)
    fg = jnp.flip(fg, axis=-1)
    fg = jnp.cumsum(fg, axis=-1)
    fg = jnp.flip(fg, axis=-1)
    return fg


if __name__ == "__main__":
    # ---- small shapes consistent with the module's forward ----
    batch, seq, dim = 2, 16, 32
    heads, dim_head = 4, 8
    post_log_scale = 1.0

    key = jax.random.PRNGKey(0)
    kx, kw = jax.random.split(key)
    x = jax.random.normal(kx, (batch, seq, dim), dtype=jnp.float32)
    # nn.Linear(dim, heads*dim_head*2, bias=False) weight: (out, in)
    weight = jax.random.normal(
        kw, (heads * dim_head * 2, dim), dtype=jnp.float32) * (dim ** -0.5)

    out = per_row_data_dependent_alibi(
        x, weight, heads=heads, dim_head=dim_head,
        post_log_scale=post_log_scale)
    out = jax.block_until_ready(out)

    ref = _reference(x, weight, heads=heads, dim_head=dim_head,
                     post_log_scale=post_log_scale)
    assert out.shape == (batch, heads, seq, seq)
    assert jnp.allclose(out, ref, atol=1e-4, rtol=1e-4), "mismatch (small)"

    # ---- tiled test exercising the right-to-left carry AND the causal
    # ---- tile-skip branch (2x2 tiles: one skipped, two diagonal, one full)
    b2, n2, d2, h2 = 1, 256, 32, 2
    k2x, k2w = jax.random.split(jax.random.PRNGKey(1))
    x2 = jax.random.normal(k2x, (b2, n2, d2), dtype=jnp.float32)
    w2 = jax.random.normal(
        k2w, (h2 * dim_head * 2, d2), dtype=jnp.float32) * (d2 ** -0.5)

    ref2 = _reference(x2, w2, heads=h2, dim_head=dim_head,
                      post_log_scale=post_log_scale)

    out2 = per_row_data_dependent_alibi(
        x2, w2, heads=h2, dim_head=dim_head,
        post_log_scale=post_log_scale, tile_q=128, tile_k=128)
    out2 = jax.block_until_ready(out2)
    assert out2.shape == (b2, h2, n2, n2)
    assert jnp.allclose(out2, ref2, atol=2e-3, rtol=2e-4), "mismatch (tiled)"

    # ---- bf16 suffix-sum matmul variant (f32 accumulation, looser tol) ----
    out3 = per_row_data_dependent_alibi(
        x2, w2, heads=h2, dim_head=dim_head,
        post_log_scale=post_log_scale, tile_q=128, tile_k=128, mxu_bf16=True)
    out3 = jax.block_until_ready(out3)
    assert jnp.allclose(out3, ref2, atol=5e-2, rtol=2e-2), "mismatch (bf16)"

    print("KERNEL_OK")
</pallas_src>

<mosaic_0001>
module attributes {stable_mosaic.version = 11 : i64} {
  func.func @_proj_kernel(%arg0: i32, %arg1: i32, %arg2: memref<1x16x32xf32, #tpu.memory_space<vmem>>, %arg3: memref<32x64xf32, #tpu.memory_space<vmem>>, %arg4: memref<1x16x64xf32, #tpu.memory_space<vmem>>) attributes {dimension_semantics = [#tpu.dimension_semantics<parallel>, #tpu.dimension_semantics<parallel>], iteration_bounds = array<i64: 2, 1>, scalar_prefetch = 0 : i64, scratch_operands = 0 : i64, tpu.core_type = #tpu.core_type<tc>, window_params = [{transform_indices = @transform_0, window_bounds = array<i64: 1, 16, 32>}, {pipeline_mode = #tpu.pipeline_mode<synchronous>, transform_indices = @transform_1, window_bounds = array<i64: 32, 64>}, {transform_indices = @transform_2, window_bounds = array<i64: 1, 16, 64>}]} {
    %c0 = arith.constant 0 : index
    %c0_0 = arith.constant 0 : index
    %c0_1 = arith.constant 0 : index
    %0 = vector.load %arg2[%c0, %c0_0, %c0_1] : memref<1x16x32xf32, #tpu.memory_space<vmem>>, vector<1x16x32xf32>
    %1 = vector.shape_cast %0 : vector<1x16x32xf32> to vector<16x32xf32>
    %c0_2 = arith.constant 0 : index
    %c0_3 = arith.constant 0 : index
    %2 = vector.load %arg3[%c0_2, %c0_3] : memref<32x64xf32, #tpu.memory_space<vmem>>, vector<32x64xf32>
    %cst = arith.constant dense<0.000000e+00> : vector<16x64xf32>
    %3 = tpu.matmul %1, %2, %cst {dimension_numbers = #tpu.dot_dimension_numbers<[1], [0], [0], [1], [0, 0, 1, 1], [], []>} : vector<16x32xf32>, vector<32x64xf32>, vector<16x64xf32> -> vector<16x64xf32>
    %c0_4 = arith.constant 0 : index
    %c0_5 = arith.constant 0 : index
    %c0_6 = arith.constant 0 : index
    %4 = vector.load %arg4[%c0_4, %c0_5, %c0_6] : memref<1x16x64xf32, #tpu.memory_space<vmem>>, vector<1x16x64xf32>
    %5 = vector.shape_cast %4 : vector<1x16x64xf32> to vector<16x64xf32>
    %6 = vector.shape_cast %3 : vector<16x64xf32> to vector<1x16x64xf32>
    tpu.vector_store %arg4[%c0_4, %c0_5, %c0_6], %6 {strides = array<i32>} : memref<1x16x64xf32, #tpu.memory_space<vmem>>, vector<1x16x64xf32>,
    return
  }
  func.func @transform_0(%arg0: i32, %arg1: i32) -> (i32, i32, i32) {
    %c0_i32 = arith.constant 0 : i32
    %c0_i32_0 = arith.constant 0 : i32
    return %arg0, %arg1, %c0_i32 : i32, i32, i32
  }
  func.func @transform_1(%arg0: i32, %arg1: i32) -> (i32, i32) {
    %c0_i32 = arith.constant 0 : i32
    %c0_i32_0 = arith.constant 0 : i32
    %c0_i32_1 = arith.constant 0 : i32
    return %c0_i32, %c0_i32_0 : i32, i32
  }
  func.func @transform_2(%arg0: i32, %arg1: i32) -> (i32, i32, i32) {
    %c0_i32 = arith.constant 0 : i32
    %c0_i32_0 = arith.constant 0 : i32
    return %arg0, %arg1, %c0_i32 : i32, i32, i32
  }
}

</mosaic_0001>

<llo_original>
// kernel: tpu_custom_call.1
$region0: #{tpu_custom_call.1}
  #allocation0 [shape = 'u32[]', space=smem, size = 0x4, offset = 0x4, fixed_abs, tag = 'smem constant byte address 0x4 - core index']
  #allocation1 [shape = 'u32[144,128]{1,0:T(1,128)}', space=vmem, size = 0x12000, scoped, tag = 'internal scratch']
  %s0 = inlined_call_operand.hbm [shape: f32[2,16,32], index: 0, kind: input, shape index: {}]
  %s1 = inlined_call_operand.hbm [shape: f32[32,64], index: 1, kind: input, shape index: {}]
  %s2 = inlined_call_operand.hbm [shape: f32[2,16,64], index: 2, kind: output, shape index: {}]
  %s3 = sld [smem:[#allocation0]]
  $region49: #{tpu_custom_call.1} parent=0
    _
  %s5 = ssub.s32 1, %s3
  %s6 = scalar_select 0, %s5, %s3
  $region1: #{tpu_custom_call.1} parent=0
    #allocation2 [shape = 'u8[16384]{0}', space=vmem, size = 0x4000, scoped, tag = 'input window, operand 0']
    #allocation3 [shape = 's32[2]{0}', space=sflag, size = 0x8, scoped, tag = 'scoped memory for tpu_custom_call.1']
    #allocation4 [shape = 's32[2]{0}', space=sflag, size = 0x8, scoped, tag = 'scoped memory for tpu_custom_call.1']
    #allocation5 [shape = 'u8[16384]{0}', space=vmem, size = 0x4000, scoped, tag = 'input window, operand 1, single buffered']
    #allocation6 [shape = 's32[1]{0}', space=sflag, size = 0x4, scoped, tag = 'scoped memory for tpu_custom_call.1']
    #allocation7 [shape = 'u8[16384]{0}', space=vmem, size = 0x4000, scoped, tag = 'output window, operand 0']
    %7 = vsyncpa [#allocation3], 0
    %s8 = scalar_lea.sflag [#allocation3], 1
    %9 = vsyncpa %s8, 0
    %10 = vsyncpa [#allocation6], 0
    %11 = vsyncpa [#allocation4], 0
    %s12 = scalar_lea.sflag [#allocation4], 1
    %13 = vsyncpa %s12, 0
    loop: start=0, step=1, limit=4
    $region2: #{tpu_custom_call.1} parent=1 // loop_pre_header
      _
    $region3: #{tpu_custom_call.1} parent=1 // loop_header
      %s15 = sphi 0, %s19
      %p16 = scmp.ge.s32.totalorder %s15, 4
      %s22 = sphi 0, %s34
      %s23 = sphi 0, %s30
      %s24 = sphi 0, %s22
      %s25 = sphi 0, %s23
      %s26 = sphi 0, %s24
      %s27 = sphi 0, %s25
      %s39 = sphi 0, %s41
      %s42 = sphi 0, %s39
      %s43 = sphi 0, %s42
      %s59 = sphi 0, %s43
      %s63 = sphi 0, %s63
      %s65 = sphi 0, %s63
      %s66 = sphi 0, %s65
      %s80 = sphi 0, %s66
      %s88 = sphi 0, %s90
      %s91 = sphi 0, %s88
      %s92 = sphi 0, %s91
      %s108 = sphi 0, %s92
    $region4: #{tpu_custom_call.1} parent=1 // loop_header_branch
      %18 = sbr.rel (%p16) target = $region8
    $region5: #{tpu_custom_call.1} parent=1 // loop_body
      %s20 = ssub.s32 %s15, 1
      %s21 = ssub.s32 %s15, 2
      %s28 = sadd.s32 1, %s23
      %p29 = scmp.ge.s32.totalorder %s28, 1
      %s30 = scalar_select %p29, 0, %s28
      %s31 = sadd.s32 1, %s22
      %s32 = scalar_select %p29, %s31, %s22
      %p33 = scmp.ge.s32.totalorder %s32, 2
      %s34 = scalar_select %p33, 0, %s32
      %s35 = ssub.s32 %s22, %s34
      %s36 = ssub.s32 %s23, %s30
      %s37 = sor.u32 %s35, %s36
      %p38 = scmp.eq.s32.totalorder %s37, 0
      %s40 = sadd.s32 %s39, 1
      %s41 = scalar_select %p38, %s39, %s40
      %p44 = pneg %p38
      %p45 = scmp.eq.s32.totalorder %s15, 1
      %p46 = por %p44, %p45
      %p47 = scmp.ne.s32.totalorder %s39, %s42
      %p48 = scmp.eq.s32.totalorder %s15, 0
      %p49 = por %p47, %p48
      %p50 = scmp.ne.s32.totalorder %s39, %s42
      %p51 = scmp.eq.s32.totalorder %s20, 1
      %p52 = por %p50, %p51
      %p53 = scmp.ne.s32.totalorder %s42, %s43
      %p54 = scmp.eq.s32.totalorder %s20, 0
      %p55 = por %p53, %p54
      %p56 = scmp.ne.s32.totalorder %s42, %s43
      %p57 = scmp.eq.s32.totalorder %s21, 1
      %p58 = por %p56, %p57
      %p60 = scmp.ne.s32.totalorder %s43, %s59
      %p61 = scmp.eq.s32.totalorder %s21, 0
      %p62 = por %p60, %p61
      %s64 = sadd.s32 %s63, 1
      %p67 = scmp.eq.s32.totalorder %s15, 1
      %p68 = scmp.ne.s32.totalorder %s63, %s65
      %p69 = scmp.eq.s32.totalorder %s15, 0
      %p70 = por %p68, %p69
      %p71 = scmp.ne.s32.totalorder %s63, %s65
      %p72 = scmp.eq.s32.totalorder %s20, 1
      %p73 = por %p71, %p72
      %p74 = scmp.ne.s32.totalorder %s65, %s66
      %p75 = scmp.eq.s32.totalorder %s20, 0
      %p76 = por %p74, %p75
      %p77 = scmp.ne.s32.totalorder %s65, %s66
      %p78 = scmp.eq.s32.totalorder %s21, 1
      %p79 = por %p77, %p78
      %p81 = scmp.ne.s32.totalorder %s66, %s80
      %p82 = scmp.eq.s32.totalorder %s21, 0
      %p83 = por %p81, %p82
      %s84 = ssub.s32 %s22, %s34
      %s85 = ssub.s32 %s23, %s30
      %s86 = sor.u32 %s84, %s85
      %p87 = scmp.eq.s32.totalorder %s86, 0
      %s89 = sadd.s32 %s88, 1
      %s90 = scalar_select %p87, %s88, %s89
      %p93 = pneg %p87
      %p94 = scmp.eq.s32.totalorder %s15, 1
      %p95 = por %p93, %p94
      %p96 = scmp.ne.s32.totalorder %s88, %s91
      %p97 = scmp.eq.s32.totalorder %s15, 0
      %p98 = por %p96, %p97
      %p99 = scmp.ne.s32.totalorder %s88, %s91
      %p100 = scmp.eq.s32.totalorder %s20, 1
      %p101 = por %p99, %p100
      %p102 = scmp.ne.s32.totalorder %s91, %s92
      %p103 = scmp.eq.s32.totalorder %s20, 0
      %p104 = por %p102, %p103
      %p105 = scmp.ne.s32.totalorder %s91, %s92
      %p106 = scmp.eq.s32.totalorder %s21, 1
      %p107 = por %p105, %p106
      %p109 = scmp.ne.s32.totalorder %s92, %s108
      %p110 = scmp.eq.s32.totalorder %s21, 0
      %p111 = por %p109, %p110
      %p112 = scmp.le.s32.totalorder 1, %s15
      %p113 = scmp.lt.s32.totalorder %s15, 3
      %p114 = pnand %p112, %p113
      %p115 = pneg %p114
      // Predicated region
      $region9: #{tpu_custom_call.1} parent=5 // pred_check
        _
      $region10: #{tpu_custom_call.1} parent=5 // pred_check_branch
        %117 = sbr.rel (%p114) target = $region12
      $region11: #{tpu_custom_call.1} parent=5 // pred_region
        %s118 = ssub.s32 %s15, 1
        // Predicated region
        $region13: #{tpu_custom_call.1} parent=11 // pred_check
          %p119 = pneg %p76
        $region14: #{tpu_custom_call.1} parent=11 // pred_check_branch
          %121 = sbr.rel (%p119) target = $region16
        $region15: #{tpu_custom_call.1} parent=11 // pred_region
          %s123 = ssub.s32 512, 512
          %124 = vsyncadd [#allocation6], %s123
          %s125 = sshll.u32 [#allocation5], 4
          %s126 = int_to_ptr.vmem [resolvable:$true] %s125
          %131 = dma.hbm_to_vmem [thread:$0]  %s1, 512, %s126, [#allocation6], 128, 128, 8
        $region16: #{tpu_custom_call.1} parent=11 // pred_fallthru
          _
      $region12: #{tpu_custom_call.1} parent=5 // pred_fallthru
        _
      %p132 = scmp.lt.s32.totalorder %s15, 2
      // Predicated region
      $region17: #{tpu_custom_call.1} parent=5 // pred_check
        %p133 = pneg %p132
      $region18: #{tpu_custom_call.1} parent=5 // pred_check_branch
        %135 = sbr.rel (%p133) target = $region20
      $region19: #{tpu_custom_call.1} parent=5 // pred_region
        // Predicated region
        $region21: #{tpu_custom_call.1} parent=19 // pred_check
          %p136 = pneg %p49
        $region22: #{tpu_custom_call.1} parent=19 // pred_check_branch
          %138 = sbr.rel (%p136) target = $region24
        $region23: #{tpu_custom_call.1} parent=19 // pred_region
          %s139 = sand.u32 %s39, 1
          %s140 = scalar_lea.sflag [#allocation3], %s139
          %s141 = sand.u32 %s39, 1
          %s142 = smul.addr %s141, 16
          %s143 = scalar_lea.vmem [#allocation2], %s142
          %s144 = smul.u32 2, %s23
          %s146 = ssub.s32 256, 256
          %147 = vsyncadd %s140, %s146
          %s148 = smul.addr %s22, 2
          %s149 = sadd.s32 %s144, %s148
          %s150 = smul.addr %s149, 128
          %s151 = scalar_lea.hbm %s0, %s150
          %s152 = sshll.u32 %s143, 4
          %s153 = int_to_ptr.vmem [resolvable:$true] %s152
          %158 = dma.hbm_to_vmem [thread:$0]  %s151, 256, %s153, %s140, 128, 128, 8
        $region24: #{tpu_custom_call.1} parent=19 // pred_fallthru
          _
      $region20: #{tpu_custom_call.1} parent=5 // pred_fallthru
        _
      %p159 = scmp.le.s32.totalorder 1, %s15
      %p160 = scmp.lt.s32.totalorder %s15, 3
      %p161 = pnand %p159, %p160
      %p162 = pneg %p161
      // Predicated region
      $region25: #{tpu_custom_call.1} parent=5 // pred_check
        _
      $region26: #{tpu_custom_call.1} parent=5 // pred_check_branch
        %164 = sbr.rel (%p161) target = $region28
      $region27: #{tpu_custom_call.1} parent=5 // pred_region
        %s165 = ssub.s32 %s15, 1
        %s166 = sand.u32 %s42, 1
        %s167 = scalar_lea.sflag [#allocation3], %s166
        %s168 = sand.u32 %s42, 1
        %s169 = smul.addr %s168, 16
        %s170 = scalar_lea.vmem [#allocation2], %s169
        // Predicated region
        $region29: #{tpu_custom_call.1} parent=27 // pred_check
          %p171 = pneg %p55
        $region30: #{tpu_custom_call.1} parent=27 // pred_check_branch
          %173 = sbr.rel (%p171) target = $region32
        $region31: #{tpu_custom_call.1} parent=27 // pred_region
          %174 = dma.done %s167, 256
        $region32: #{tpu_custom_call.1} parent=27 // pred_fallthru
          _
        // Predicated region
        $region33: #{tpu_custom_call.1} parent=27 // pred_check
          %p175 = pneg %p76
        $region34: #{tpu_custom_call.1} parent=27 // pred_check_branch
          %177 = sbr.rel (%p175) target = $region36
        $region35: #{tpu_custom_call.1} parent=27 // pred_region
          %178 = dma.done [#allocation6], 512
        $region36: #{tpu_custom_call.1} parent=27 // pred_fallthru
          _
        %s179 = sand.u32 %s42, 1
        %s180 = scalar_lea.sflag [#allocation3], %s179
        %s181 = sand.u32 %s42, 1
        %s182 = smul.addr %s181, 16
        %s183 = scalar_lea.vmem [#allocation2], %s182
        %p184 = pneg %p55
        %p185 = pneg %p52
        %p186 = pneg %p76
        %p187 = pneg %p73
        %p188 = pneg %p104
        %p189 = pneg %p101
        %s190 = sand.u32 %s91, 1
        %s191 = scalar_lea.sflag [#allocation4], %s190
        %s192 = sand.u32 %s91, 1
        %s193 = smul.addr %s192, 16
        %s194 = scalar_lea.vmem [#allocation7], %s193
        %s195 = smul.u32 2, %s25
        %s196 = smul.u32 2, %s25
        %v197 = vld [vmem:[%s170] sm:$0xff]
        %v198 = vld [vmem:[%s170 + $0x8] sm:$0xff]
        %v199 = vld [vmem:[#allocation5] sm:$0xff]
        %v200 = vld [vmem:[#allocation5 + $0x8] sm:$0xff]
        %v201 = vld [vmem:[#allocation5 + $0x10] sm:$0xff]
        %v202 = vld [vmem:[#allocation5 + $0x18] sm:$0xff]
        %vm203 = vcmask 261120
        %v205 = vsel %vm203, %v197, 0
        %v208 = vsel %vm203, %v198, 0
        %210 = vmatprep.subr.mxu0 0.0
        %211 = vmatpush1.msra.mxu0 0.0
        %212 = vmatprep.subr.mxu0 0.0
        %213 = vmatpush1.msra.mxu0 0.0
        %214 = vmatprep.subr.mxu0 0.0
        %215 = vmatpush1.msra.mxu0 0.0
        %216 = vmatprep.subr.mxu0 0.0
        %217 = vmatpush1.msra.mxu0 0.0
        %218 = vmatprep.subr.mxu0 0.0
        %219 = vmatpush1.msra.mxu0 0.0
        %220 = vmatprep.subr.mxu0 0.0
        %221 = vmatpush1.msra.mxu0 0.0
        %222 = vmatprep.subr.mxu0 0.0
        %223 = vmatpush1.msra.mxu0 0.0
        %224 = vmatprep.subr.mxu0 0.0
        %225 = vmatpush1.msra.mxu0 0.0
        %226 = vmatprep.subr.mxu0 0.0
        %227 = vmatpush1.msra.mxu0 0.0
        %228 = vmatprep.subr.mxu0 0.0
        %229 = vmatpush1.msra.mxu0 0.0
        %230 = vmatprep.subr.mxu0 0.0
        %231 = vmatpush1.msra.mxu0 0.0
        %232 = vmatprep.subr.mxu0 0.0
        %233 = vmatpush1.msra.mxu0 0.0
        %234 = vmatprep.subr.mxu0 0.0
        %235 = vmatpush1.msra.mxu0 %v202
        %236 = vmatprep.subr.mxu0 0.0
        %237 = vmatpush1.msra.mxu0 %v201
        %238 = vmatprep.subr.mxu0 0.0
        %239 = vmatpush1.msra.mxu0 %v200
        %240 = vmatprep.subr.mxu0 0.0
        %241 = vmatpush1.msra.mxu0 %v199
        %242 = vmatprep.subr.mxu0 0.0
        %243 = vmatpush2.msra.mxu0 0.0
        %244 = vmatprep.subr.mxu0 0.0
        %245 = vmatpush2.msra.mxu0 0.0
        %246 = vmatprep.subr.mxu0 0.0
        %247 = vmatpush2.msra.mxu0 0.0
        %248 = vmatprep.subr.mxu0 0.0
        %249 = vmatpush2.msra.mxu0 0.0
        %250 = vmatprep.subr.mxu0 0.0
        %251 = vmatpush2.msra.mxu0 0.0
        %252 = vmatprep.subr.mxu0 0.0
        %253 = vmatpush2.msra.mxu0 0.0
        %254 = vmatprep.subr.mxu0 0.0
        %255 = vmatpush2.msra.mxu0 0.0
        %256 = vmatprep.subr.mxu0 0.0
        %257 = vmatpush2.msra.mxu0 0.0
        %258 = vmatprep.subr.mxu0 0.0
        %259 = vmatpush2.msra.mxu0 0.0
        %260 = vmatprep.subr.mxu0 0.0
        %261 = vmatpush2.msra.mxu0 0.0
        %262 = vmatprep.subr.mxu0 0.0
        %263 = vmatpush2.msra.mxu0 0.0
        %264 = vmatprep.subr.mxu0 0.0
        %265 = vmatpush2.msra.mxu0 0.0
        %266 = vmatprep.subr.mxu0 0.0
        %267 = vmatpush2.msra.mxu0 0.0
        %268 = vmatprep.subr.mxu0 0.0
        %269 = vmatpush2.msra.mxu0 0.0
        %270 = vmatprep.subr.mxu0 0.0
        %271 = vmatpush2.msra.mxu0 0.0
        %272 = vmatprep.subr.mxu0 0.0
        %273 = vmatpush2.msra.mxu0 0.0
        %274 = vmatprep.mubr.f32.mxu0 0.0
        %275 = vmatmul.mubr.f32.gmra.mxu0 %v205
        %v276 = vpop.f32.mrf.mxu0
        %v277 = vadd.f32 0.0, %v276
        %v278 = vpop.f32.mrf.mxu0
        %279 = vmatprep.mubr.f32.mxu0 0.0
        %280 = vmatmul.mubr.f32.gmra.mxu0 %v208
        %v281 = vpop.f32.mrf.mxu0
        %v282 = vadd.f32 0.0, %v281
        %v283 = vpop.f32.mrf.mxu0
        %284 = vdwg.mxu0
        %vm285 = vcmask 523264
        %286 = vst.msk [vmem:[%s194] sm:$0xff] %vm285, %v277
        %287 = vst.msk [vmem:[%s194 + $0x8] sm:$0xff] %vm285, %v282
        %s288 = sand.u32 %s91, 1
        %s289 = scalar_lea.sflag [#allocation4], %s288
        %s290 = sand.u32 %s91, 1
        %s291 = smul.addr %s290, 16
        %s292 = scalar_lea.vmem [#allocation7], %s291
        // Predicated region
        $region37: #{tpu_custom_call.1} parent=27 // pred_check
          %p293 = pneg %p101
        $region38: #{tpu_custom_call.1} parent=27 // pred_check_branch
          %295 = sbr.rel (%p293) target = $region40
        $region39: #{tpu_custom_call.1} parent=27 // pred_region
          %s296 = smul.u32 2, %s25
          %s298 = ssub.s32 256, 256
          %299 = vsyncadd %s289, %s298
          %s300 = smul.addr %s24, 2
          %s301 = sadd.s32 %s296, %s300
          %s302 = smul.addr %s301, 128
          %s303 = scalar_lea.hbm %s2, %s302
          %s304 = sshll.u32 %s292, 4
          %s305 = int_to_ptr.vmem [resolvable:$true] %s304
          %310 = dma.vmem_to_hbm [thread:$0]  %s305, 256, %s303, %s289, 128, 128, 8
        $region40: #{tpu_custom_call.1} parent=27 // pred_fallthru
          _
      $region28: #{tpu_custom_call.1} parent=5 // pred_fallthru
        _
      %p311 = scmp.le.s32.totalorder 2, %s15
      // Predicated region
      $region41: #{tpu_custom_call.1} parent=5 // pred_check
        %p312 = pneg %p311
      $region42: #{tpu_custom_call.1} parent=5 // pred_check_branch
        %314 = sbr.rel (%p312) target = $region44
      $region43: #{tpu_custom_call.1} parent=5 // pred_region
        %s315 = ssub.s32 %s15, 2
        // Predicated region
        $region45: #{tpu_custom_call.1} parent=43 // pred_check
          %p316 = pneg %p107
        $region46: #{tpu_custom_call.1} parent=43 // pred_check_branch
          %318 = sbr.rel (%p316) target = $region48
        $region47: #{tpu_custom_call.1} parent=43 // pred_region
          %s319 = sand.u32 %s92, 1
          %s320 = scalar_lea.sflag [#allocation4], %s319
          %s321 = sand.u32 %s92, 1
          %s322 = smul.addr %s321, 16
          %s323 = scalar_lea.vmem [#allocation7], %s322
          %324 = dma.done %s320, 256
        $region48: #{tpu_custom_call.1} parent=43 // pred_fallthru
          _
      $region44: #{tpu_custom_call.1} parent=5 // pred_fallthru
        _
    $region6: #{tpu_custom_call.1} parent=1 // loop_footer
      %s19 = sadd.s32 1, %s15
    $region7: #{tpu_custom_call.1} parent=1 // loop_footer_branch
      %14 = sbr.rel target = $region3
    $region8: #{tpu_custom_call.1} parent=1 // loop_exit
      _
    %325 = vsyncpa [#allocation3], 1
    %s326 = scalar_lea.sflag [#allocation3], 1
    %327 = vsyncpa %s326, 1
    %328 = vsyncpa [#allocation6], 1
    %329 = vsyncpa [#allocation4], 1
    %s330 = scalar_lea.sflag [#allocation4], 1
    %331 = vsyncpa %s330, 1

</llo_original>
